<compile_context>
chip_gen: v6e
topology: v6e:2x2x1
jax: 0.10.0
libtpu: 0.0.40
codegen_flags: <defaults>
</compile_context>

<pallas_src>
import jax
import jax.numpy as jnp
from jax.experimental import pallas as pl
from jax.experimental.pallas import tpu as pltpu


def _linear_kernel(x_ref, w_ref, b_ref, o_ref):
    # x_ref: (B, F)   w_ref: (F, N_pad)   b_ref: (1, N_pad)   o_ref: (B, N_pad)
    acc = jnp.dot(x_ref[...], w_ref[...], preferred_element_type=jnp.float32)
    o_ref[...] = (acc + b_ref[...]).astype(o_ref.dtype)


def pad_params(weight, bias, lane=128):
    """One-time param prep: pad class dim to a multiple of 128 and transpose.

    weight: (N, F) PyTorch layout, bias: (N,).
    Returns (weight_t_padded (F, N_pad), bias_padded (1, N_pad), N).
    Doing the pad + transpose once at init keeps all per-call kernel traffic
    lane-dense and in the MXU's native (M,K)x(K,N) feed.
    """
    N, _ = weight.shape
    n_pad = ((N + lane - 1) // lane) * lane
    if n_pad != N:
        weight = jnp.pad(weight, ((0, n_pad - N), (0, 0)))
        bias = jnp.pad(bias, ((0, n_pad - N),))
    return jnp.asarray(weight).T, jnp.asarray(bias).reshape(1, n_pad), N


def resnet_top_forward_padded(x, weight_t_padded, bias_padded_2d):
    """Hot path.  x: (B, F) f32; weight_t_padded: (F, N_pad); bias: (1, N_pad).

    Returns padded logits (B, N_pad); columns >= num_classes are exactly 0.
    Slice / mask in the consumer (loss, argmax) if needed.
    """
    B, F = x.shape
    n_pad = weight_t_padded.shape[1]

    bytes_f32 = 4
    cost = pl.CostEstimate(
        flops=2 * B * F * n_pad,
        transcendentals=0,
        bytes_accessed=(x.size + weight_t_padded.size
                        + bias_padded_2d.size + B * n_pad) * bytes_f32,
    )

    # Single invocation, everything VMEM-resident: no grid, full-array blocks.
    vmem = pl.BlockSpec(memory_space=pltpu.MemorySpace.VMEM)
    return pl.pallas_call(
        _linear_kernel,
        out_shape=jax.ShapeDtypeStruct((B, n_pad), x.dtype),
        in_specs=[vmem, vmem, vmem],
        out_specs=vmem,
        cost_estimate=cost,
    )(x, weight_t_padded, bias_padded_2d)


def resnet_top_forward(x, weight_t_padded, bias_padded_2d, num_classes):
    """Module-faithful forward: returns (B, num_classes) logits."""
    return resnet_top_forward_padded(x, weight_t_padded, bias_padded_2d)[:, :num_classes]


if __name__ == "__main__":
    # Small shapes consistent with the module: num_clients=4 -> in_features=64.
    num_clients = 4
    num_classes = 1000
    in_features = 16 * num_clients
    batch = 8

    key = jax.random.PRNGKey(0)
    kx, kw, kb = jax.random.split(key, 3)

    x = jax.random.normal(kx, (batch, in_features), dtype=jnp.float32)
    # PyTorch Linear default init: U(-1/sqrt(F), 1/sqrt(F)).
    bound = 1.0 / jnp.sqrt(jnp.float32(in_features))
    weight = jax.random.uniform(kw, (num_classes, in_features),
                                dtype=jnp.float32, minval=-bound, maxval=bound)
    bias = jax.random.uniform(kb, (num_classes,),
                              dtype=jnp.float32, minval=-bound, maxval=bound)

    # One-time ("model init") pad + transpose of the parameters.
    w_t_pad, b_pad2d, n_out = pad_params(weight, bias)

    # Hot path returns padded logits; slice off the hot path for the check.
    out_padded = resnet_top_forward_padded(x, w_t_pad, b_pad2d)
    out_padded = jax.block_until_ready(out_padded)
    out = out_padded[:, :n_out]

    # Correctness check against plain JAX reference.
    ref = x @ weight.T + bias
    assert out.shape == (batch, num_classes)
    assert jnp.allclose(out, ref, atol=1e-4, rtol=1e-4)
    # Padded columns must be exactly zero (zero weight rows / bias entries).
    assert jnp.all(out_padded[:, n_out:] == 0.0)

    print("KERNEL_OK")
</pallas_src>

<mosaic_0001>
module attributes {stable_mosaic.version = 11 : i64} {
  func.func @_linear_kernel(%arg0: memref<8x64xf32, #tpu.memory_space<vmem>>, %arg1: memref<64x1024xf32, #tpu.memory_space<vmem>>, %arg2: memref<1x1024xf32, #tpu.memory_space<vmem>>, %arg3: memref<8x1024xf32, #tpu.memory_space<vmem>>) attributes {dimension_semantics = [], scalar_prefetch = 0 : i64, scratch_operands = 0 : i64, tpu.core_type = #tpu.core_type<tc>} {
    %c0 = arith.constant 0 : index
    %c0_0 = arith.constant 0 : index
    %0 = vector.load %arg0[%c0, %c0_0] : memref<8x64xf32, #tpu.memory_space<vmem>>, vector<8x64xf32>
    %c0_1 = arith.constant 0 : index
    %c0_2 = arith.constant 0 : index
    %1 = vector.load %arg1[%c0_1, %c0_2] : memref<64x1024xf32, #tpu.memory_space<vmem>>, vector<64x1024xf32>
    %cst = arith.constant dense<0.000000e+00> : vector<8x1024xf32>
    %2 = tpu.matmul %0, %1, %cst {dimension_numbers = #tpu.dot_dimension_numbers<[1], [0], [0], [1], [0, 0, 1, 1], [], []>} : vector<8x64xf32>, vector<64x1024xf32>, vector<8x1024xf32> -> vector<8x1024xf32>
    %c0_3 = arith.constant 0 : index
    %c0_4 = arith.constant 0 : index
    %3 = vector.load %arg2[%c0_3, %c0_4] : memref<1x1024xf32, #tpu.memory_space<vmem>>, vector<1x1024xf32>
    %4 = vector.broadcast %3 : vector<1x1024xf32> to vector<8x1024xf32>
    %5 = arith.addf %2, %4 : vector<8x1024xf32>
    %c0_5 = arith.constant 0 : index
    %c0_6 = arith.constant 0 : index
    %6 = vector.load %arg3[%c0_5, %c0_6] : memref<8x1024xf32, #tpu.memory_space<vmem>>, vector<8x1024xf32>
    tpu.vector_store %arg3[%c0_5, %c0_6], %5 {strides = array<i32>} : memref<8x1024xf32, #tpu.memory_space<vmem>>, vector<8x1024xf32>,
    return
  }
}

</mosaic_0001>

<llo_original>
// kernel: tpu_custom_call.1
$region0: #{tpu_custom_call.1}
  #allocation0 [shape = 'u32[]', space=smem, size = 0x4, offset = 0x4, fixed_abs, tag = 'smem constant byte address 0x4 - core index']
  #allocation1 [shape = 'u32[144,128]{1,0:T(1,128)}', space=vmem, size = 0x12000, scoped, tag = 'internal scratch']
  %s0 = inlined_call_operand.hbm [shape: f32[8,64], index: 0, kind: input, shape index: {}]
  %s1 = inlined_call_operand.hbm [shape: f32[64,1024], index: 1, kind: input, shape index: {}]
  %s2 = inlined_call_operand.hbm [shape: f32[1,1024], index: 2, kind: input, shape index: {}]
  %s3 = inlined_call_operand.hbm [shape: f32[8,1024], index: 3, kind: output, shape index: {}]
  %s4 = sld [smem:[#allocation0]]
  $region34: #{tpu_custom_call.1} parent=0
    _
  %s6 = ssub.s32 1, %s4
  %s7 = scalar_select 0, %s6, %s4
  $region1: #{tpu_custom_call.1} parent=0
    #allocation2 [shape = 'u8[4096]{0}', space=vmem, size = 0x1000, scoped, tag = 'input window, operand 0, single buffered']
    #allocation3 [shape = 's32[1]{0}', space=sflag, size = 0x4, scoped, tag = 'scoped memory for tpu_custom_call.1']
    #allocation4 [shape = 's32[1]{0}', space=sflag, size = 0x4, scoped, tag = 'scoped memory for tpu_custom_call.1']
    #allocation5 [shape = 'u8[262144]{0}', space=vmem, size = 0x40000, scoped, tag = 'input window, operand 1, single buffered']
    #allocation6 [shape = 's32[1]{0}', space=sflag, size = 0x4, scoped, tag = 'scoped memory for tpu_custom_call.1']
    #allocation7 [shape = 'u8[4096]{0}', space=vmem, size = 0x1000, scoped, tag = 'input window, operand 2, single buffered']
    #allocation8 [shape = 'u8[32768]{0}', space=vmem, size = 0x8000, scoped, tag = 'output window, operand 0, single buffered']
    %8 = vsyncpa [#allocation3], 0
    %9 = vsyncpa [#allocation6], 0
    %10 = vsyncpa [#allocation4], 0
    // Predicated region
    $region2: #{tpu_custom_call.1} parent=1 // pred_check
      _
    $region3: #{tpu_custom_call.1} parent=1 // pred_check_branch
      %12 = sbr.rel (0) target = $region5
    $region4: #{tpu_custom_call.1} parent=1 // pred_region
      %s14 = ssub.s32 128, 128
      %15 = vsyncadd [#allocation3], %s14
      %s17 = sshll.u32 [#allocation2], 4
      %s18 = int_to_ptr.vmem [resolvable:$true] %s17
      %20 = dma.hbm_to_vmem [thread:$0]  %s0, 128, %s18, [#allocation3]
    $region5: #{tpu_custom_call.1} parent=1 // pred_fallthru
      _
    // Predicated region
    $region6: #{tpu_custom_call.1} parent=1 // pred_check
      _
    $region7: #{tpu_custom_call.1} parent=1 // pred_check_branch
      %22 = sbr.rel (0) target = $region9
    $region8: #{tpu_custom_call.1} parent=1 // pred_region
      %s24 = ssub.s32 8192, 8192
      %25 = vsyncadd [#allocation6], %s24
      %s26 = sshll.u32 [#allocation5], 4
      %s27 = int_to_ptr.vmem [resolvable:$true] %s26
      %32 = dma.hbm_to_vmem [thread:$0]  %s1, 8192, %s27, [#allocation6], 1024, 1024, 64
    $region9: #{tpu_custom_call.1} parent=1 // pred_fallthru
      _
    // Predicated region
    $region10: #{tpu_custom_call.1} parent=1 // pred_check
      _
    $region11: #{tpu_custom_call.1} parent=1 // pred_check_branch
      %34 = sbr.rel (0) target = $region13
    $region12: #{tpu_custom_call.1} parent=1 // pred_region
      %s36 = ssub.s32 128, 128
      %37 = vsyncadd [#allocation6], %s36
      %s39 = sshll.u32 [#allocation7], 4
      %s40 = int_to_ptr.vmem [resolvable:$true] %s39
      %42 = dma.hbm_to_vmem [thread:$0]  %s2, 128, %s40, [#allocation6]
    $region13: #{tpu_custom_call.1} parent=1 // pred_fallthru
      _
    // Predicated region
    $region14: #{tpu_custom_call.1} parent=1 // pred_check
      _
    $region15: #{tpu_custom_call.1} parent=1 // pred_check_branch
      %44 = sbr.rel (0) target = $region17
    $region16: #{tpu_custom_call.1} parent=1 // pred_region
      %45 = dma.done [#allocation3], 128
    $region17: #{tpu_custom_call.1} parent=1 // pred_fallthru
      _
    // Predicated region
    $region18: #{tpu_custom_call.1} parent=1 // pred_check
      _
    $region19: #{tpu_custom_call.1} parent=1 // pred_check_branch
      %47 = sbr.rel (0) target = $region21
    $region20: #{tpu_custom_call.1} parent=1 // pred_region
      %48 = dma.done [#allocation6], 8192
    $region21: #{tpu_custom_call.1} parent=1 // pred_fallthru
      _
    // Predicated region
    $region22: #{tpu_custom_call.1} parent=1 // pred_check
      _
    $region23: #{tpu_custom_call.1} parent=1 // pred_check_branch
      %50 = sbr.rel (0) target = $region25
    $region24: #{tpu_custom_call.1} parent=1 // pred_region
      %51 = dma.done [#allocation6], 128
    $region25: #{tpu_custom_call.1} parent=1 // pred_fallthru
      _
    %v52 = vld [vmem:[#allocation2] sm:$0xff]
    %v53 = vld [vmem:[#allocation5] sm:$0xff]
    %v54 = vld [vmem:[#allocation5 + $0x8] sm:$0xff]
    %v55 = vld [vmem:[#allocation5 + $0x10] sm:$0xff]
    %v56 = vld [vmem:[#allocation5 + $0x18] sm:$0xff]
    %v57 = vld [vmem:[#allocation5 + $0x20] sm:$0xff]
    %v58 = vld [vmem:[#allocation5 + $0x28] sm:$0xff]
    %v59 = vld [vmem:[#allocation5 + $0x30] sm:$0xff]
    %v60 = vld [vmem:[#allocation5 + $0x38] sm:$0xff]
    %v61 = vld [vmem:[#allocation5 + $0x40] sm:$0xff]
    %v62 = vld [vmem:[#allocation5 + $0x48] sm:$0xff]
    %v63 = vld [vmem:[#allocation5 + $0x50] sm:$0xff]
    %v64 = vld [vmem:[#allocation5 + $0x58] sm:$0xff]
    %v65 = vld [vmem:[#allocation5 + $0x60] sm:$0xff]
    %v66 = vld [vmem:[#allocation5 + $0x68] sm:$0xff]
    %v67 = vld [vmem:[#allocation5 + $0x70] sm:$0xff]
    %v68 = vld [vmem:[#allocation5 + $0x78] sm:$0xff]
    %v69 = vld [vmem:[#allocation5 + $0x80] sm:$0xff]
    %v70 = vld [vmem:[#allocation5 + $0x88] sm:$0xff]
    %v71 = vld [vmem:[#allocation5 + $0x90] sm:$0xff]
    %v72 = vld [vmem:[#allocation5 + $0x98] sm:$0xff]
    %v73 = vld [vmem:[#allocation5 + $0xa0] sm:$0xff]
    %v74 = vld [vmem:[#allocation5 + $0xa8] sm:$0xff]
    %v75 = vld [vmem:[#allocation5 + $0xb0] sm:$0xff]
    %v76 = vld [vmem:[#allocation5 + $0xb8] sm:$0xff]
    %v77 = vld [vmem:[#allocation5 + $0xc0] sm:$0xff]
    %v78 = vld [vmem:[#allocation5 + $0xc8] sm:$0xff]
    %v79 = vld [vmem:[#allocation5 + $0xd0] sm:$0xff]
    %v80 = vld [vmem:[#allocation5 + $0xd8] sm:$0xff]
    %v81 = vld [vmem:[#allocation5 + $0xe0] sm:$0xff]
    %v82 = vld [vmem:[#allocation5 + $0xe8] sm:$0xff]
    %v83 = vld [vmem:[#allocation5 + $0xf0] sm:$0xff]
    %v84 = vld [vmem:[#allocation5 + $0xf8] sm:$0xff]
    %v85 = vld [vmem:[#allocation5 + $0x100] sm:$0xff]
    %v86 = vld [vmem:[#allocation5 + $0x108] sm:$0xff]
    %v87 = vld [vmem:[#allocation5 + $0x110] sm:$0xff]
    %v88 = vld [vmem:[#allocation5 + $0x118] sm:$0xff]
    %v89 = vld [vmem:[#allocation5 + $0x120] sm:$0xff]
    %v90 = vld [vmem:[#allocation5 + $0x128] sm:$0xff]
    %v91 = vld [vmem:[#allocation5 + $0x130] sm:$0xff]
    %v92 = vld [vmem:[#allocation5 + $0x138] sm:$0xff]
    %v93 = vld [vmem:[#allocation5 + $0x140] sm:$0xff]
    %v94 = vld [vmem:[#allocation5 + $0x148] sm:$0xff]
    %v95 = vld [vmem:[#allocation5 + $0x150] sm:$0xff]
    %v96 = vld [vmem:[#allocation5 + $0x158] sm:$0xff]
    %v97 = vld [vmem:[#allocation5 + $0x160] sm:$0xff]
    %v98 = vld [vmem:[#allocation5 + $0x168] sm:$0xff]
    %v99 = vld [vmem:[#allocation5 + $0x170] sm:$0xff]
    %v100 = vld [vmem:[#allocation5 + $0x178] sm:$0xff]
    %v101 = vld [vmem:[#allocation5 + $0x180] sm:$0xff]
    %v102 = vld [vmem:[#allocation5 + $0x188] sm:$0xff]
    %v103 = vld [vmem:[#allocation5 + $0x190] sm:$0xff]
    %v104 = vld [vmem:[#allocation5 + $0x198] sm:$0xff]
    %v105 = vld [vmem:[#allocation5 + $0x1a0] sm:$0xff]
    %v106 = vld [vmem:[#allocation5 + $0x1a8] sm:$0xff]
    %v107 = vld [vmem:[#allocation5 + $0x1b0] sm:$0xff]
    %v108 = vld [vmem:[#allocation5 + $0x1b8] sm:$0xff]
    %v109 = vld [vmem:[#allocation5 + $0x1c0] sm:$0xff]
    %v110 = vld [vmem:[#allocation5 + $0x1c8] sm:$0xff]
    %v111 = vld [vmem:[#allocation5 + $0x1d0] sm:$0xff]
    %v112 = vld [vmem:[#allocation5 + $0x1d8] sm:$0xff]
    %v113 = vld [vmem:[#allocation5 + $0x1e0] sm:$0xff]
    %v114 = vld [vmem:[#allocation5 + $0x1e8] sm:$0xff]
    %v115 = vld [vmem:[#allocation5 + $0x1f0] sm:$0xff]
    %v116 = vld [vmem:[#allocation5 + $0x1f8] sm:$0xff]
    %v117 = vld [vmem:[#allocation7] sm:$0xff]
    %v119 = vlaneseq
    %v120 = vshrl.u32 %v119, 7
    %v121 = vsub.s32 0, %v120
    %v122 = vrot.slane %v117, %v121
    %v123 = vlaneseq
    %v124 = vshrl.u32 %v123, 7
    %v125 = vsub.s32 1, %v124
    %v126 = vrot.slane %v117, %v125
    %v127 = vlaneseq
    %v128 = vshrl.u32 %v127, 7
    %v129 = vsub.s32 2, %v128
    %v130 = vrot.slane %v117, %v129
    %v131 = vlaneseq
    %v132 = vshrl.u32 %v131, 7
    %v133 = vsub.s32 3, %v132
    %v134 = vrot.slane %v117, %v133
    %v135 = vlaneseq
    %v136 = vshrl.u32 %v135, 7
    %v137 = vsub.s32 4, %v136
    %v138 = vrot.slane %v117, %v137
    %v139 = vlaneseq
    %v140 = vshrl.u32 %v139, 7
    %v141 = vsub.s32 5, %v140
    %v142 = vrot.slane %v117, %v141
    %v143 = vlaneseq
    %v144 = vshrl.u32 %v143, 7
    %v145 = vsub.s32 6, %v144
    %v146 = vrot.slane %v117, %v145
    %v147 = vlaneseq
    %v148 = vshrl.u32 %v147, 7
    %v149 = vsub.s32 7, %v148
    %v150 = vrot.slane %v117, %v149
    %vm159 = vcmask 523264
    %v161 = vsel %vm159, %v52, 0
    %163 = vmatprep.subr.mxu0 0.0
    %164 = vmatpush1.msra.mxu0 0.0
    %165 = vmatprep.subr.mxu0 0.0
    %166 = vmatpush1.msra.mxu0 0.0
    %167 = vmatprep.subr.mxu0 0.0
    %168 = vmatpush1.msra.mxu0 0.0
    %169 = vmatprep.subr.mxu0 0.0
    %170 = vmatpush1.msra.mxu0 0.0
    %171 = vmatprep.subr.mxu0 0.0
    %172 = vmatpush1.msra.mxu0 0.0
    %173 = vmatprep.subr.mxu0 0.0
    %174 = vmatpush1.msra.mxu0 0.0
    %175 = vmatprep.subr.mxu0 0.0
    %176 = vmatpush1.msra.mxu0 0.0
    %177 = vmatprep.subr.mxu0 0.0
    %178 = vmatpush1.msra.mxu0 0.0
    %179 = vmatprep.subr.mxu0 %v110
    %180 = vmatpush1.msra.mxu0 %v109
    %181 = vmatprep.subr.mxu0 %v102
    %182 = vmatpush1.msra.mxu0 %v101
    %183 = vmatprep.subr.mxu0 %v94
    %184 = vmatpush1.msra.mxu0 %v93
    %185 = vmatprep.subr.mxu0 %v86
    %186 = vmatpush1.msra.mxu0 %v85
    %187 = vmatprep.subr.mxu0 %v78
    %188 = vmatpush1.msra.mxu0 %v77
    %189 = vmatprep.subr.mxu0 %v70
    %190 = vmatpush1.msra.mxu0 %v69
    %191 = vmatprep.subr.mxu0 %v62
    %192 = vmatpush1.msra.mxu0 %v61
    %193 = vmatprep.subr.mxu0 %v54
    %194 = vmatpush1.msra.mxu0 %v53
    %195 = vmatprep.subr.mxu0 0.0
    %196 = vmatpush2.msra.mxu0 0.0
    %197 = vmatprep.subr.mxu0 0.0
    %198 = vmatpush2.msra.mxu0 0.0
    %199 = vmatprep.subr.mxu0 0.0
    %200 = vmatpush2.msra.mxu0 0.0
    %201 = vmatprep.subr.mxu0 0.0
    %202 = vmatpush2.msra.mxu0 0.0
    %203 = vmatprep.subr.mxu0 0.0
    %204 = vmatpush2.msra.mxu0 0.0
    %205 = vmatprep.subr.mxu0 0.0
    %206 = vmatpush2.msra.mxu0 0.0
    %207 = vmatprep.subr.mxu0 0.0
    %208 = vmatpush2.msra.mxu0 0.0
    %209 = vmatprep.subr.mxu0 0.0
    %210 = vmatpush2.msra.mxu0 0.0
    %211 = vmatprep.subr.mxu0 0.0
    %212 = vmatpush2.msra.mxu0 0.0
    %213 = vmatprep.subr.mxu0 0.0
    %214 = vmatpush2.msra.mxu0 0.0
    %215 = vmatprep.subr.mxu0 0.0
    %216 = vmatpush2.msra.mxu0 0.0
    %217 = vmatprep.subr.mxu0 0.0
    %218 = vmatpush2.msra.mxu0 0.0
    %219 = vmatprep.subr.mxu0 0.0
    %220 = vmatpush2.msra.mxu0 0.0
    %221 = vmatprep.subr.mxu0 0.0
    %222 = vmatpush2.msra.mxu0 0.0
    %223 = vmatprep.subr.mxu0 0.0
    %224 = vmatpush2.msra.mxu0 0.0
    %225 = vmatprep.subr.mxu0 0.0
    %226 = vmatpush2.msra.mxu0 0.0
    %227 = vmatprep.mubr.f32.mxu0 0.0
    %228 = vmatmul.mubr.f32.gmra.mxu0 %v161
    %v229 = vpop.f32.mrf.mxu0
    %v230 = vadd.f32 %v122, %v229
    %v231 = vpop.f32.mrf.mxu0
    %v232 = vadd.f32 %v126, %v231
    %233 = vdwg.mxu0
    %234 = vmatprep.subr.mxu0 0.0
    %235 = vmatpush1.msra.mxu0 0.0
    %236 = vmatprep.subr.mxu0 0.0
    %237 = vmatpush1.msra.mxu0 0.0
    %238 = vmatprep.subr.mxu0 0.0
    %239 = vmatpush1.msra.mxu0 0.0
    %240 = vmatprep.subr.mxu0 0.0
    %241 = vmatpush1.msra.mxu0 0.0
    %242 = vmatprep.subr.mxu0 0.0
    %243 = vmatpush1.msra.mxu0 0.0
    %244 = vmatprep.subr.mxu0 0.0
    %245 = vmatpush1.msra.mxu0 0.0
    %246 = vmatprep.subr.mxu0 0.0
    %247 = vmatpush1.msra.mxu0 0.0
    %248 = vmatprep.subr.mxu0 0.0
    %249 = vmatpush1.msra.mxu0 0.0
    %250 = vmatprep.subr.mxu0 %v112
    %251 = vmatpush1.msra.mxu0 %v111
    %252 = vmatprep.subr.mxu0 %v104
    %253 = vmatpush1.msra.mxu0 %v103
    %254 = vmatprep.subr.mxu0 %v96
    %255 = vmatpush1.msra.mxu0 %v95
    %256 = vmatprep.subr.mxu0 %v88
    %257 = vmatpush1.msra.mxu0 %v87
    %258 = vmatprep.subr.mxu0 %v80
    %259 = vmatpush1.msra.mxu0 %v79
    %260 = vmatprep.subr.mxu0 %v72
    %261 = vmatpush1.msra.mxu0 %v71
    %262 = vmatprep.subr.mxu0 %v64
    %263 = vmatpush1.msra.mxu0 %v63
    %264 = vmatprep.subr.mxu0 %v56
    %265 = vmatpush1.msra.mxu0 %v55
    %266 = vmatprep.subr.mxu0 0.0
    %267 = vmatpush2.msra.mxu0 0.0
    %268 = vmatprep.subr.mxu0 0.0
    %269 = vmatpush2.msra.mxu0 0.0
    %270 = vmatprep.subr.mxu0 0.0
    %271 = vmatpush2.msra.mxu0 0.0
    %272 = vmatprep.subr.mxu0 0.0
    %273 = vmatpush2.msra.mxu0 0.0
    %274 = vmatprep.subr.mxu0 0.0
    %275 = vmatpush2.msra.mxu0 0.0
    %276 = vmatprep.subr.mxu0 0.0
    %277 = vmatpush2.msra.mxu0 0.0
    %278 = vmatprep.subr.mxu0 0.0
    %279 = vmatpush2.msra.mxu0 0.0
    %280 = vmatprep.subr.mxu0 0.0
    %281 = vmatpush2.msra.mxu0 0.0
    %282 = vmatprep.subr.mxu0 0.0
    %283 = vmatpush2.msra.mxu0 0.0
    %284 = vmatprep.subr.mxu0 0.0
    %285 = vmatpush2.msra.mxu0 0.0
    %286 = vmatprep.subr.mxu0 0.0
    %287 = vmatpush2.msra.mxu0 0.0
    %288 = vmatprep.subr.mxu0 0.0
    %289 = vmatpush2.msra.mxu0 0.0
    %290 = vmatprep.subr.mxu0 0.0
    %291 = vmatpush2.msra.mxu0 0.0
    %292 = vmatprep.subr.mxu0 0.0
    %293 = vmatpush2.msra.mxu0 0.0
    %294 = vmatprep.subr.mxu0 0.0
    %295 = vmatpush2.msra.mxu0 0.0
    %296 = vmatprep.subr.mxu0 0.0
    %297 = vmatpush2.msra.mxu0 0.0
    %298 = vmatprep.mubr.f32.mxu0 0.0
    %299 = vmatmul.mubr.f32.gmra.mxu0 %v161
    %v300 = vpop.f32.mrf.mxu0
    %v301 = vadd.f32 %v130, %v300
    %v302 = vpop.f32.mrf.mxu0
    %v303 = vadd.f32 %v134, %v302
    %304 = vdwg.mxu0
    %305 = vmatprep.subr.mxu0 0.0
    %306 = vmatpush1.msra.mxu0 0.0
    %307 = vmatprep.subr.mxu0 0.0
    %308 = vmatpush1.msra.mxu0 0.0
    %309 = vmatprep.subr.mxu0 0.0
    %310 = vmatpush1.msra.mxu0 0.0
    %311 = vmatprep.subr.mxu0 0.0
    %312 = vmatpush1.msra.mxu0 0.0
    %313 = vmatprep.subr.mxu0 0.0
    %314 = vmatpush1.msra.mxu0 0.0
    %315 = vmatprep.subr.mxu0 0.0
    %316 = vmatpush1.msra.mxu0 0.0
    %317 = vmatprep.subr.mxu0 0.0
    %318 = vmatpush1.msra.mxu0 0.0
    %319 = vmatprep.subr.mxu0 0.0
    %320 = vmatpush1.msra.mxu0 0.0
    %321 = vmatprep.subr.mxu0 %v114
    %322 = vmatpush1.msra.mxu0 %v113
    %323 = vmatprep.subr.mxu0 %v106
    %324 = vmatpush1.msra.mxu0 %v105
    %325 = vmatprep.subr.mxu0 %v98
    %326 = vmatpush1.msra.mxu0 %v97
    %327 = vmatprep.subr.mxu0 %v90
    %328 = vmatpush1.msra.mxu0 %v89
    %329 = vmatprep.subr.mxu0 %v82
    %330 = vmatpush1.msra.mxu0 %v81
    %331 = vmatprep.subr.mxu0 %v74
    %332 = vmatpush1.msra.mxu0 %v73
    %333 = vmatprep.subr.mxu0 %v66
    %334 = vmatpush1.msra.mxu0 %v65
    %335 = vmatprep.subr.mxu0 %v58
    %336 = vmatpush1.msra.mxu0 %v57
    %337 = vmatprep.subr.mxu0 0.0
    %338 = vmatpush2.msra.mxu0 0.0
    %339 = vmatprep.subr.mxu0 0.0
    %340 = vmatpush2.msra.mxu0 0.0
    %341 = vmatprep.subr.mxu0 0.0
    %342 = vmatpush2.msra.mxu0 0.0
    %343 = vmatprep.subr.mxu0 0.0
    %344 = vmatpush2.msra.mxu0 0.0
    %345 = vmatprep.subr.mxu0 0.0
    %346 = vmatpush2.msra.mxu0 0.0
    %347 = vmatprep.subr.mxu0 0.0
    %348 = vmatpush2.msra.mxu0 0.0
    %349 = vmatprep.subr.mxu0 0.0
    %350 = vmatpush2.msra.mxu0 0.0
    %351 = vmatprep.subr.mxu0 0.0
    %352 = vmatpush2.msra.mxu0 0.0
    %353 = vmatprep.subr.mxu0 0.0
    %354 = vmatpush2.msra.mxu0 0.0
    %355 = vmatprep.subr.mxu0 0.0
    %356 = vmatpush2.msra.mxu0 0.0
    %357 = vmatprep.subr.mxu0 0.0
    %358 = vmatpush2.msra.mxu0 0.0
    %359 = vmatprep.subr.mxu0 0.0
    %360 = vmatpush2.msra.mxu0 0.0
    %361 = vmatprep.subr.mxu0 0.0
    %362 = vmatpush2.msra.mxu0 0.0
    %363 = vmatprep.subr.mxu0 0.0
    %364 = vmatpush2.msra.mxu0 0.0
    %365 = vmatprep.subr.mxu0 0.0
    %366 = vmatpush2.msra.mxu0 0.0
    %367 = vmatprep.subr.mxu0 0.0
    %368 = vmatpush2.msra.mxu0 0.0
    %369 = vmatprep.mubr.f32.mxu0 0.0
    %370 = vmatmul.mubr.f32.gmra.mxu0 %v161
    %v371 = vpop.f32.mrf.mxu0
    %v372 = vadd.f32 %v138, %v371
    %v373 = vpop.f32.mrf.mxu0
    %v374 = vadd.f32 %v142, %v373
    %375 = vdwg.mxu0
    %376 = vmatprep.subr.mxu0 0.0
    %377 = vmatpush1.msra.mxu0 0.0
    %378 = vmatprep.subr.mxu0 0.0
    %379 = vmatpush1.msra.mxu0 0.0
    %380 = vmatprep.subr.mxu0 0.0
    %381 = vmatpush1.msra.mxu0 0.0
    %382 = vmatprep.subr.mxu0 0.0
    %383 = vmatpush1.msra.mxu0 0.0
    %384 = vmatprep.subr.mxu0 0.0
    %385 = vmatpush1.msra.mxu0 0.0
    %386 = vmatprep.subr.mxu0 0.0
    %387 = vmatpush1.msra.mxu0 0.0
    %388 = vmatprep.subr.mxu0 0.0
    %389 = vmatpush1.msra.mxu0 0.0
    %390 = vmatprep.subr.mxu0 0.0
    %391 = vmatpush1.msra.mxu0 0.0
    %392 = vmatprep.subr.mxu0 %v116
    %393 = vmatpush1.msra.mxu0 %v115
    %394 = vmatprep.subr.mxu0 %v108
    %395 = vmatpush1.msra.mxu0 %v107
    %396 = vmatprep.subr.mxu0 %v100
    %397 = vmatpush1.msra.mxu0 %v99
    %398 = vmatprep.subr.mxu0 %v92
    %399 = vmatpush1.msra.mxu0 %v91
    %400 = vmatprep.subr.mxu0 %v84
    %401 = vmatpush1.msra.mxu0 %v83
    %402 = vmatprep.subr.mxu0 %v76
    %403 = vmatpush1.msra.mxu0 %v75
    %404 = vmatprep.subr.mxu0 %v68
    %405 = vmatpush1.msra.mxu0 %v67
    %406 = vmatprep.subr.mxu0 %v60
    %407 = vmatpush1.msra.mxu0 %v59
    %408 = vmatprep.subr.mxu0 0.0
    %409 = vmatpush2.msra.mxu0 0.0
    %410 = vmatprep.subr.mxu0 0.0
    %411 = vmatpush2.msra.mxu0 0.0
    %412 = vmatprep.subr.mxu0 0.0
    %413 = vmatpush2.msra.mxu0 0.0
    %414 = vmatprep.subr.mxu0 0.0
    %415 = vmatpush2.msra.mxu0 0.0
    %416 = vmatprep.subr.mxu0 0.0
    %417 = vmatpush2.msra.mxu0 0.0
    %418 = vmatprep.subr.mxu0 0.0
    %419 = vmatpush2.msra.mxu0 0.0
    %420 = vmatprep.subr.mxu0 0.0
    %421 = vmatpush2.msra.mxu0 0.0
    %422 = vmatprep.subr.mxu0 0.0
    %423 = vmatpush2.msra.mxu0 0.0
    %424 = vmatprep.subr.mxu0 0.0
    %425 = vmatpush2.msra.mxu0 0.0
    %426 = vmatprep.subr.mxu0 0.0
    %427 = vmatpush2.msra.mxu0 0.0
    %428 = vmatprep.subr.mxu0 0.0
    %429 = vmatpush2.msra.mxu0 0.0
    %430 = vmatprep.subr.mxu0 0.0
    %431 = vmatpush2.msra.mxu0 0.0
    %432 = vmatprep.subr.mxu0 0.0
    %433 = vmatpush2.msra.mxu0 0.0
    %434 = vmatprep.subr.mxu0 0.0
    %435 = vmatpush2.msra.mxu0 0.0
    %436 = vmatprep.subr.mxu0 0.0
    %437 = vmatpush2.msra.mxu0 0.0
    %438 = vmatprep.subr.mxu0 0.0
    %439 = vmatpush2.msra.mxu0 0.0
    %440 = vmatprep.mubr.f32.mxu0 0.0
    %441 = vmatmul.mubr.f32.gmra.mxu0 %v161
    %v442 = vpop.f32.mrf.mxu0
    %v443 = vadd.f32 %v146, %v442
    %v444 = vpop.f32.mrf.mxu0
    %v445 = vadd.f32 %v150, %v444
    %446 = vdwg.mxu0
    %447 = vst [vmem:[#allocation8] sm:$0xff] %v230
    %448 = vst [vmem:[#allocation8 + $0x8] sm:$0xff] %v232
    %449 = vst [vmem:[#allocation8 + $0x10] sm:$0xff] %v301
    %450 = vst [vmem:[#allocation8 + $0x18] sm:$0xff] %v303
    %451 = vst [vmem:[#allocation8 + $0x20] sm:$0xff] %v372
    %452 = vst [vmem:[#allocation8 + $0x28] sm:$0xff] %v374
    %453 = vst [vmem:[#allocation8 + $0x30] sm:$0xff] %v443
    %454 = vst [vmem:[#allocation8 + $0x38] sm:$0xff] %v445
    // Predicated region
    $region26: #{tpu_custom_call.1} parent=1 // pred_check
      _
    $region27: #{tpu_custom_call.1} parent=1 // pred_check_branch
      %456 = sbr.rel (0) target = $region29
    $region28: #{tpu_custom_call.1} parent=1 // pred_region
      %s458 = ssub.s32 1024, 1024
      %459 = vsyncadd [#allocation4], %s458
      %s461 = sshll.u32 [#allocation8], 4
      %s462 = int_to_ptr.vmem [resolvable:$true] %s461
      %464 = dma.vmem_to_hbm [thread:$0]  %s462, 1024, %s3, [#allocation4]
    $region29: #{tpu_custom_call.1} parent=1 // pred_fallthru
      _
    // Predicated region
    $region30: #{tpu_custom_call.1} parent=1 // pred_check
      _
    $region31: #{tpu_custom_call.1} parent=1 // pred_check_branch
      %466 = sbr.rel (0) target = $region33
    $region32: #{tpu_custom_call.1} parent=1 // pred_region
      %467 = dma.done [#allocation4], 1024
    $region33: #{tpu_custom_call.1} parent=1 // pred_fallthru
      _
    %468 = vsyncpa [#allocation3], 1
    %469 = vsyncpa [#allocation6], 1
    %470 = vsyncpa [#allocation4], 1

</llo_original>
